<compile_context>
chip_gen: v7x
topology: tpu7x:2x2x1
jax: 0.10.0
libtpu: 0.0.40
codegen_flags: <defaults>
</compile_context>

<pallas_src>
import math
import functools

import jax
import jax.numpy as jnp
from jax import lax
from jax.experimental import pallas as pl
from jax.experimental.pallas import tpu as pltpu


# ----------------------------------------------------------------------------
# Small helpers
# ----------------------------------------------------------------------------
def _pick_block(t, candidates=(256, 128, 64, 32, 16, 8)):
    """Largest candidate block size that divides t (falls back to t itself)."""
    for c in candidates:
        if t >= c and t % c == 0:
            return c
    return t


def _heads_per_group(num_heads, head_dim):
    """Largest divisor g of num_heads with g*head_dim <= 128 lanes."""
    best = 1
    for g in range(1, num_heads + 1):
        if num_heads % g == 0 and g * head_dim <= 128:
            best = g
    return best


def _vmem_limit(bytes_needed):
    """Scoped-VMEM limit from actual buffer footprint + headroom, <= 64 MiB (v7x)."""
    budget = int(bytes_needed * 1.5) + (4 << 20)
    return min(max(budget, 32 << 20), 64 << 20)


# ----------------------------------------------------------------------------
# Kernel 1: QKV projection (three streaming dots, single-buffered weights).
# ----------------------------------------------------------------------------
def qkv_proj_kernel(x_ref, wq_ref, wk_ref, wv_ref, q_ref, k_ref, v_ref, *, scale):
    x = x_ref[0]                                                     # [rows, E] bf16
    q = jnp.dot(x, wq_ref[...], preferred_element_type=jnp.float32)  # f32 acc
    q_ref[0] = (q * scale).astype(q_ref.dtype)                       # 1/sqrt(D) folded into q
    k = jnp.dot(x, wk_ref[...], preferred_element_type=jnp.float32)
    k_ref[0] = k.astype(k_ref.dtype)
    v = jnp.dot(x, wv_ref[...], preferred_element_type=jnp.float32)
    v_ref[0] = v.astype(v_ref.dtype)


# ----------------------------------------------------------------------------
# Kernel 2: flash attention over a triangular (qi, ki) step axis
#           + fused output projection on the diagonal (last) step.
# ----------------------------------------------------------------------------
def flash_mha_kernel(qi_tbl, ki_tbl,                       # scalar-prefetch (SMEM)
                     q_ref, k_ref, v_ref, wo_ref, bo_ref,  # inputs
                     o_ref,                                # output
                     m_scr, l_scr, acc_scr,                # scratch
                     *, num_heads, head_dim, heads_per_group, block_q, block_kv):
    step = pl.program_id(1)
    qi = qi_tbl[step]
    ki = ki_tbl[step]

    num_groups = num_heads // heads_per_group
    gw = heads_per_group * head_dim        # group lane width (<= 128 for D<=128)
    rep = m_scr.shape[-1]                  # lane replication width of m/l state (128)

    @pl.when(ki == 0)
    def _init():
        m_scr[...] = jnp.full(m_scr.shape, -jnp.inf, dtype=m_scr.dtype)
        l_scr[...] = jnp.zeros(l_scr.shape, dtype=l_scr.dtype)
        acc_scr[...] = jnp.zeros(acc_scr.shape, dtype=acc_scr.dtype)

    def _attend(masked):
        q = q_ref[0]                       # [bq,  E] bf16 (already * 1/sqrt(D))
        k = k_ref[0]                       # [bkv, E] bf16
        v = v_ref[0]                       # [bkv, E] bf16
        if masked:
            # Diagonal block only (qi == ki, square blocks): mask is row >= col.
            row = lax.broadcasted_iota(jnp.int32, (block_q, block_kv), 0)
            col = lax.broadcasted_iota(jnp.int32, (block_q, block_kv), 1)
            causal = row >= col

        for g in range(num_groups):        # static unroll over lane-dense head groups
            g_sl = slice(g * gw, (g + 1) * gw)
            pv_parts = []
            alpha_parts = []
            for hh in range(heads_per_group):
                h = g * heads_per_group + hh
                h_sl = slice(h * head_dim, (h + 1) * head_dim)
                qh = q[:, h_sl]            # [bq,  D]
                kh = k[:, h_sl]            # [bkv, D]
                vh = v[:, h_sl]            # [bkv, D]

                # q . k^T via dot_general (no explicit transpose), f32 accumulation.
                s = lax.dot_general(qh, kh, (((1,), (1,)), ((), ())),
                                    preferred_element_type=jnp.float32)  # [bq, bkv]
                if masked:
                    s = jnp.where(causal, s, -jnp.inf)

                # Lane-replicated online-softmax state: full-lane loads/stores only.
                m_prev = m_scr[h]                                      # [bq, rep]
                l_prev = l_scr[h]                                      # [bq, rep]
                s_max = jnp.max(s, axis=-1, keepdims=True)             # [bq, 1]
                m_new = jnp.maximum(m_prev, s_max)                     # [bq, rep]
                alpha = jnp.exp(m_prev - m_new)                        # [bq, rep]
                m_b = m_new if block_kv == rep else m_new[:, :1]
                p = jnp.exp(s - m_b)                                   # [bq, bkv] f32
                l_scr[h] = alpha * l_prev + jnp.sum(p, axis=-1, keepdims=True)
                m_scr[h] = m_new

                pv = lax.dot_general(p.astype(v.dtype), vh, (((1,), (0,)), ((), ())),
                                     preferred_element_type=jnp.float32)  # [bq, D]
                pv_parts.append(pv)
                if head_dim <= rep:
                    alpha_parts.append(alpha[:, :head_dim])
                else:
                    alpha_parts.append(jnp.broadcast_to(alpha[:, :1], (block_q, head_dim)))

            pv_slab = pv_parts[0] if len(pv_parts) == 1 else jnp.concatenate(pv_parts, axis=-1)
            a_slab = alpha_parts[0] if len(alpha_parts) == 1 else jnp.concatenate(alpha_parts, axis=-1)
            # One lane-dense read-modify-write of the context accumulator per group.
            acc_scr[:, g_sl] = a_slab * acc_scr[:, g_sl] + pv_slab

    @pl.when(ki < qi)
    def _off_diagonal():
        _attend(masked=False)

    @pl.when(ki == qi)
    def _diagonal_and_finalize():
        _attend(masked=True)
        # Finalize on the diagonal step (the last step for this q block):
        # normalize, fuse the output projection, store one lane-dense [bq, E] slab.
        ctx_parts = []
        for g in range(num_groups):
            g_sl = slice(g * gw, (g + 1) * gw)
            inv_parts = []
            for hh in range(heads_per_group):
                h = g * heads_per_group + hh
                inv_l = pl.reciprocal(l_scr[h], approx=True)            # EUP slot
                if head_dim <= rep:
                    inv_parts.append(inv_l[:, :head_dim])
                else:
                    inv_parts.append(jnp.broadcast_to(inv_l[:, :1], (block_q, head_dim)))
            inv_slab = inv_parts[0] if len(inv_parts) == 1 else jnp.concatenate(inv_parts, axis=-1)
            ctx_parts.append(acc_scr[:, g_sl] * inv_slab)
        ctx = ctx_parts[0] if len(ctx_parts) == 1 else jnp.concatenate(ctx_parts, axis=-1)
        ctx = ctx.astype(jnp.bfloat16)                                   # [bq, E]
        y = jnp.dot(ctx, wo_ref[...], preferred_element_type=jnp.float32)
        o_ref[0] = (y + bo_ref[...]).astype(o_ref.dtype)


# ----------------------------------------------------------------------------
# Wrapper
# ----------------------------------------------------------------------------
def multi_head_attention(x, wq, wk, wv, wo, bo, *, num_heads,
                         block_q=None, block_kv=None, out_dtype=None):
    B, T, E = x.shape
    assert E % num_heads == 0
    D = E // num_heads
    if out_dtype is None:
        # Keeps reference semantics; pass jnp.bfloat16 to halve the output HBM write.
        out_dtype = x.dtype
    if block_q is None:
        block_q = _pick_block(T)           # 256 on v6e/v7x-friendly shapes, else smaller
    if block_kv is None:
        block_kv = block_q
    assert block_q == block_kv, "triangular enumeration / diagonal mask assume square blocks"
    assert T % block_q == 0
    nq = T // block_q
    scale = 1.0 / math.sqrt(D)

    # bf16 MXU inputs (halves DMA / VMEM residency); f32 accumulation inside.
    x_bf = x.astype(jnp.bfloat16)
    wq_bf = wq.astype(jnp.bfloat16)
    wk_bf = wk.astype(jnp.bfloat16)
    wv_bf = wv.astype(jnp.bfloat16)
    wo_bf = wo.astype(jnp.bfloat16)
    bo_f32 = bo.astype(jnp.float32).reshape(1, E)

    # --- 1) QKV projection ----------------------------------------------------
    proj_rows = _pick_block(T, (512, 256, 128, 64, 32, 16, 8))   # decoupled from block_q
    n_proj = T // proj_rows

    k1_bytes = (proj_rows * E * 2 * 2            # x block, double-buffered
                + 3 * E * E * 2 * 2              # weights (headroom even when single-buffered)
                + 3 * proj_rows * E * 2 * 2)     # q/k/v output blocks

    q, k, v = pl.pallas_call(
        functools.partial(qkv_proj_kernel, scale=scale),
        out_shape=(jax.ShapeDtypeStruct((B, T, E), jnp.bfloat16),) * 3,
        grid_spec=pltpu.PrefetchScalarGridSpec(
            num_scalar_prefetch=0,
            grid=(B, n_proj),
            in_specs=[
                pl.BlockSpec((1, proj_rows, E), lambda b, i: (b, i, 0)),              # x
                pl.BlockSpec((E, E), lambda b, i: (0, 0), pipeline_mode=pl.Buffered(1)),  # Wq
                pl.BlockSpec((E, E), lambda b, i: (0, 0), pipeline_mode=pl.Buffered(1)),  # Wk
                pl.BlockSpec((E, E), lambda b, i: (0, 0), pipeline_mode=pl.Buffered(1)),  # Wv
            ],
            out_specs=[
                pl.BlockSpec((1, proj_rows, E), lambda b, i: (b, i, 0)),
                pl.BlockSpec((1, proj_rows, E), lambda b, i: (b, i, 0)),
                pl.BlockSpec((1, proj_rows, E), lambda b, i: (b, i, 0)),
            ],
        ),
        compiler_params=pltpu.CompilerParams(
            dimension_semantics=("parallel", "parallel"),
            vmem_limit_bytes=_vmem_limit(k1_bytes)),
    )(x_bf, wq_bf, wk_bf, wv_bf)

    # --- 2) flash attention + fused output projection --------------------------
    # Triangular (qi, ki) enumeration: only the lower-triangle blocks are visited.
    qi_list, ki_list = [], []
    for qi in range(nq):
        for ki in range(qi + 1):
            qi_list.append(qi)
            ki_list.append(ki)
    qi_tbl = jnp.asarray(qi_list, dtype=jnp.int32)
    ki_tbl = jnp.asarray(ki_list, dtype=jnp.int32)
    num_steps = len(qi_list)

    hpg = _heads_per_group(num_heads, D)     # e.g. 2 for GPT-2 base (D=64) -> 128-lane slabs
    rep = 128                                # lane replication width for m/l state

    out_bytes = jnp.dtype(out_dtype).itemsize
    k2_bytes = (3 * block_q * E * 2 * 2                  # q/k/v blocks, double-buffered
                + E * E * 2 * 2 + E * 4 * 2              # Wo + bo (headroom)
                + block_q * E * out_bytes * 2            # output block
                + 2 * num_heads * block_q * rep * 4      # m/l scratch
                + block_q * E * 4)                       # context accumulator

    kernel = functools.partial(
        flash_mha_kernel, num_heads=num_heads, head_dim=D,
        heads_per_group=hpg, block_q=block_q, block_kv=block_kv)

    out = pl.pallas_call(
        kernel,
        out_shape=jax.ShapeDtypeStruct((B, T, E), out_dtype),
        grid_spec=pltpu.PrefetchScalarGridSpec(
            num_scalar_prefetch=2,
            grid=(B, num_steps),
            in_specs=[
                pl.BlockSpec((1, block_q, E),
                             lambda b, s, qi_t, ki_t: (b, qi_t[s], 0)),          # q
                pl.BlockSpec((1, block_kv, E),
                             lambda b, s, qi_t, ki_t: (b, ki_t[s], 0)),          # k
                pl.BlockSpec((1, block_kv, E),
                             lambda b, s, qi_t, ki_t: (b, ki_t[s], 0)),          # v
                pl.BlockSpec((E, E), lambda b, s, qi_t, ki_t: (0, 0),
                             pipeline_mode=pl.Buffered(1)),                      # Wo
                pl.BlockSpec((1, E), lambda b, s, qi_t, ki_t: (0, 0),
                             pipeline_mode=pl.Buffered(1)),                      # bo
            ],
            out_specs=pl.BlockSpec((1, block_q, E),
                                   lambda b, s, qi_t, ki_t: (b, qi_t[s], 0)),
            scratch_shapes=[
                pltpu.VMEM((num_heads, block_q, rep), jnp.float32),  # running max (lane-replicated)
                pltpu.VMEM((num_heads, block_q, rep), jnp.float32),  # running sum (lane-replicated)
                pltpu.VMEM((block_q, E), jnp.float32),               # per-head context accumulator
            ],
        ),
        compiler_params=pltpu.CompilerParams(
            dimension_semantics=("parallel", "arbitrary"),
            vmem_limit_bytes=_vmem_limit(k2_bytes)),
    )(qi_tbl, ki_tbl, q, k, v, wo_bf, bo_f32)
    return out


# ----------------------------------------------------------------------------
# Pure-JAX reference mirroring the PyTorch forward exactly (f32).
# ----------------------------------------------------------------------------
def reference_mha(x, wq, wk, wv, wo, bo, *, num_heads):
    B, T, E = x.shape
    H = num_heads
    D = E // H
    q = (x @ wq).reshape(B, T, H, D).transpose(0, 2, 1, 3)
    k = (x @ wk).reshape(B, T, H, D).transpose(0, 2, 1, 3)
    v = (x @ wv).reshape(B, T, H, D).transpose(0, 2, 1, 3)
    scores = jnp.einsum('bhtd,bhsd->bhts', q, k) / math.sqrt(D)
    mask = jnp.tril(jnp.ones((T, T)))
    scores = jnp.where(mask == 0, -jnp.inf, scores)
    p = jax.nn.softmax(scores, axis=-1)
    ctx = jnp.einsum('bhts,bhsd->bhtd', p, v)
    ctx = ctx.transpose(0, 2, 1, 3).reshape(B, T, E)
    return ctx @ wo + bo


if __name__ == "__main__":
    # Small GPT-2-like config (qkv_bias=False, output projection has bias).
    B, T, E, H = 2, 8, 32, 4

    key = jax.random.PRNGKey(0)
    kx, kq, kk, kv, ko, kb = jax.random.split(key, 6)
    x = jax.random.normal(kx, (B, T, E), dtype=jnp.float32)
    wq = 0.02 * jax.random.normal(kq, (E, E), dtype=jnp.float32)
    wk = 0.02 * jax.random.normal(kk, (E, E), dtype=jnp.float32)
    wv = 0.02 * jax.random.normal(kv, (E, E), dtype=jnp.float32)
    wo = 0.02 * jax.random.normal(ko, (E, E), dtype=jnp.float32)
    bo = 0.02 * jax.random.normal(kb, (1, E), dtype=jnp.float32)

    out = multi_head_attention(x, wq, wk, wv, wo, bo, num_heads=H)
    out = jax.block_until_ready(out)

    ref = reference_mha(x, wq, wk, wv, wo, bo, num_heads=H)
    assert out.shape == (B, T, E)
    # bf16 MXU inputs -> compare against the f32 reference with bf16-level slack.
    assert jnp.allclose(out, ref, atol=2e-2, rtol=2e-2), "mismatch vs reference"

    print("KERNEL_OK")
</pallas_src>

<mosaic_0001>
module attributes {stable_mosaic.version = 11 : i64} {
  func.func @qkv_proj_kernel(%arg0: i32, %arg1: i32, %arg2: memref<1x8x32xbf16, #tpu.memory_space<vmem>>, %arg3: memref<32x32xbf16, #tpu.memory_space<vmem>>, %arg4: memref<32x32xbf16, #tpu.memory_space<vmem>>, %arg5: memref<32x32xbf16, #tpu.memory_space<vmem>>, %arg6: memref<1x8x32xbf16, #tpu.memory_space<vmem>>, %arg7: memref<1x8x32xbf16, #tpu.memory_space<vmem>>, %arg8: memref<1x8x32xbf16, #tpu.memory_space<vmem>>) attributes {dimension_semantics = [#tpu.dimension_semantics<parallel>, #tpu.dimension_semantics<parallel>], iteration_bounds = array<i64: 2, 1>, scalar_prefetch = 0 : i64, scratch_operands = 0 : i64, tpu.core_type = #tpu.core_type<tc>, window_params = [{transform_indices = @transform_0, window_bounds = array<i64: 1, 8, 32>}, {pipeline_mode = #tpu.pipeline_mode<synchronous>, transform_indices = @transform_1, window_bounds = array<i64: 32, 32>}, {pipeline_mode = #tpu.pipeline_mode<synchronous>, transform_indices = @transform_2, window_bounds = array<i64: 32, 32>}, {pipeline_mode = #tpu.pipeline_mode<synchronous>, transform_indices = @transform_3, window_bounds = array<i64: 32, 32>}, {transform_indices = @transform_4, window_bounds = array<i64: 1, 8, 32>}, {transform_indices = @transform_5, window_bounds = array<i64: 1, 8, 32>}, {transform_indices = @transform_6, window_bounds = array<i64: 1, 8, 32>}]} {
    %c0 = arith.constant 0 : index
    %c0_0 = arith.constant 0 : index
    %c0_1 = arith.constant 0 : index
    %0 = vector.load %arg2[%c0, %c0_0, %c0_1] : memref<1x8x32xbf16, #tpu.memory_space<vmem>>, vector<1x8x32xbf16>
    %1 = vector.shape_cast %0 : vector<1x8x32xbf16> to vector<8x32xbf16>
    %c0_2 = arith.constant 0 : index
    %c0_3 = arith.constant 0 : index
    %2 = vector.load %arg3[%c0_2, %c0_3] : memref<32x32xbf16, #tpu.memory_space<vmem>>, vector<32x32xbf16>
    %cst = arith.constant dense<0.000000e+00> : vector<8x32xf32>
    %3 = tpu.matmul %1, %2, %cst {dimension_numbers = #tpu.dot_dimension_numbers<[1], [0], [0], [1], [0, 0, 1, 1], [], []>} : vector<8x32xbf16>, vector<32x32xbf16>, vector<8x32xf32> -> vector<8x32xf32>
    %cst_4 = arith.constant 0.353553385 : f32
    %4 = vector.broadcast %cst_4 : f32 to vector<8x32xf32>
    %5 = arith.mulf %3, %4 : vector<8x32xf32>
    %6 = arith.truncf %5 : vector<8x32xf32> to vector<8x32xbf16>
    %c0_5 = arith.constant 0 : index
    %c0_6 = arith.constant 0 : index
    %c0_7 = arith.constant 0 : index
    %7 = vector.load %arg6[%c0_5, %c0_6, %c0_7] : memref<1x8x32xbf16, #tpu.memory_space<vmem>>, vector<1x8x32xbf16>
    %8 = vector.shape_cast %7 : vector<1x8x32xbf16> to vector<8x32xbf16>
    %9 = vector.shape_cast %6 : vector<8x32xbf16> to vector<1x8x32xbf16>
    tpu.vector_store %arg6[%c0_5, %c0_6, %c0_7], %9 {strides = array<i32>} : memref<1x8x32xbf16, #tpu.memory_space<vmem>>, vector<1x8x32xbf16>,
    %c0_8 = arith.constant 0 : index
    %c0_9 = arith.constant 0 : index
    %10 = vector.load %arg4[%c0_8, %c0_9] : memref<32x32xbf16, #tpu.memory_space<vmem>>, vector<32x32xbf16>
    %cst_10 = arith.constant dense<0.000000e+00> : vector<8x32xf32>
    %11 = tpu.matmul %1, %10, %cst_10 {dimension_numbers = #tpu.dot_dimension_numbers<[1], [0], [0], [1], [0, 0, 1, 1], [], []>} : vector<8x32xbf16>, vector<32x32xbf16>, vector<8x32xf32> -> vector<8x32xf32>
    %12 = arith.truncf %11 : vector<8x32xf32> to vector<8x32xbf16>
    %c0_11 = arith.constant 0 : index
    %c0_12 = arith.constant 0 : index
    %c0_13 = arith.constant 0 : index
    %13 = vector.load %arg7[%c0_11, %c0_12, %c0_13] : memref<1x8x32xbf16, #tpu.memory_space<vmem>>, vector<1x8x32xbf16>
    %14 = vector.shape_cast %13 : vector<1x8x32xbf16> to vector<8x32xbf16>
    %15 = vector.shape_cast %12 : vector<8x32xbf16> to vector<1x8x32xbf16>
    tpu.vector_store %arg7[%c0_11, %c0_12, %c0_13], %15 {strides = array<i32>} : memref<1x8x32xbf16, #tpu.memory_space<vmem>>, vector<1x8x32xbf16>,
    %c0_14 = arith.constant 0 : index
    %c0_15 = arith.constant 0 : index
    %16 = vector.load %arg5[%c0_14, %c0_15] : memref<32x32xbf16, #tpu.memory_space<vmem>>, vector<32x32xbf16>
    %cst_16 = arith.constant dense<0.000000e+00> : vector<8x32xf32>
    %17 = tpu.matmul %1, %16, %cst_16 {dimension_numbers = #tpu.dot_dimension_numbers<[1], [0], [0], [1], [0, 0, 1, 1], [], []>} : vector<8x32xbf16>, vector<32x32xbf16>, vector<8x32xf32> -> vector<8x32xf32>
    %18 = arith.truncf %17 : vector<8x32xf32> to vector<8x32xbf16>
    %c0_17 = arith.constant 0 : index
    %c0_18 = arith.constant 0 : index
    %c0_19 = arith.constant 0 : index
    %19 = vector.load %arg8[%c0_17, %c0_18, %c0_19] : memref<1x8x32xbf16, #tpu.memory_space<vmem>>, vector<1x8x32xbf16>
    %20 = vector.shape_cast %19 : vector<1x8x32xbf16> to vector<8x32xbf16>
    %21 = vector.shape_cast %18 : vector<8x32xbf16> to vector<1x8x32xbf16>
    tpu.vector_store %arg8[%c0_17, %c0_18, %c0_19], %21 {strides = array<i32>} : memref<1x8x32xbf16, #tpu.memory_space<vmem>>, vector<1x8x32xbf16>,
    return
  }
  func.func @transform_0(%arg0: i32, %arg1: i32) -> (i32, i32, i32) {
    %c0_i32 = arith.constant 0 : i32
    %c0_i32_0 = arith.constant 0 : i32
    return %arg0, %arg1, %c0_i32 : i32, i32, i32
  }
  func.func @transform_1(%arg0: i32, %arg1: i32) -> (i32, i32) {
    %c0_i32 = arith.constant 0 : i32
    %c0_i32_0 = arith.constant 0 : i32
    %c0_i32_1 = arith.constant 0 : i32
    return %c0_i32, %c0_i32_0 : i32, i32
  }
  func.func @transform_2(%arg0: i32, %arg1: i32) -> (i32, i32) {
    %c0_i32 = arith.constant 0 : i32
    %c0_i32_0 = arith.constant 0 : i32
    %c0_i32_1 = arith.constant 0 : i32
    return %c0_i32, %c0_i32_0 : i32, i32
  }
  func.func @transform_3(%arg0: i32, %arg1: i32) -> (i32, i32) {
    %c0_i32 = arith.constant 0 : i32
    %c0_i32_0 = arith.constant 0 : i32
    %c0_i32_1 = arith.constant 0 : i32
    return %c0_i32, %c0_i32_0 : i32, i32
  }
  func.func @transform_4(%arg0: i32, %arg1: i32) -> (i32, i32, i32) {
    %c0_i32 = arith.constant 0 : i32
    %c0_i32_0 = arith.constant 0 : i32
    return %arg0, %arg1, %c0_i32 : i32, i32, i32
  }
  func.func @transform_5(%arg0: i32, %arg1: i32) -> (i32, i32, i32) {
    %c0_i32 = arith.constant 0 : i32
    %c0_i32_0 = arith.constant 0 : i32
    return %arg0, %arg1, %c0_i32 : i32, i32, i32
  }
  func.func @transform_6(%arg0: i32, %arg1: i32) -> (i32, i32, i32) {
    %c0_i32 = arith.constant 0 : i32
    %c0_i32_0 = arith.constant 0 : i32
    return %arg0, %arg1, %c0_i32 : i32, i32, i32
  }
}

</mosaic_0001>

<llo_original>
// kernel: tpu_custom_call.1
$region0: #{tpu_custom_call.1}
  #allocation0 [shape = 'u32[]', space=smem, size = 0x4, offset = 0x4, fixed_abs, tag = 'smem constant byte address 0x4 - core index']
  #allocation1 [shape = 'u32[144,128]{1,0:T(1,128)}', space=vmem, size = 0x12000, scoped, tag = 'internal scratch']
  %s0 = inlined_call_operand.hbm [shape: bf16[2,8,32], index: 0, kind: input, shape index: {}]
  %s1 = inlined_call_operand.hbm [shape: bf16[32,32], index: 1, kind: input, shape index: {}]
  %s2 = inlined_call_operand.hbm [shape: bf16[32,32], index: 2, kind: input, shape index: {}]
  %s3 = inlined_call_operand.hbm [shape: bf16[32,32], index: 3, kind: input, shape index: {}]
  %s4 = inlined_call_operand.hbm [shape: bf16[2,8,32], index: 4, kind: output, shape index: {0}]
  %s5 = inlined_call_operand.hbm [shape: bf16[2,8,32], index: 5, kind: output, shape index: {1}]
  %s6 = inlined_call_operand.hbm [shape: bf16[2,8,32], index: 6, kind: output, shape index: {2}]
  %7 = xla_tuple %s4, %s5, %s6
  %s8 = sld [smem:[#allocation0]]
  $region81: #{tpu_custom_call.1} parent=0
    _
  %s10 = ssub.s32 1, %s8
  %s11 = scalar_select 0, %s10, %s8
  $region1: #{tpu_custom_call.1} parent=0
    #allocation2 [shape = 'u8[4096]{0}', space=vmem, size = 0x1000, scoped, tag = 'input window, operand 0']
    #allocation3 [shape = 's32[2]{0}', space=sflag, size = 0x8, scoped, tag = 'scoped memory for tpu_custom_call.1']
    #allocation4 [shape = 's32[2]{0}', space=sflag, size = 0x8, scoped, tag = 'scoped memory for tpu_custom_call.1']
    #allocation5 [shape = 'u8[8192]{0}', space=vmem, size = 0x2000, scoped, tag = 'input window, operand 1, single buffered']
    #allocation6 [shape = 's32[1]{0}', space=sflag, size = 0x4, scoped, tag = 'scoped memory for tpu_custom_call.1']
    #allocation7 [shape = 'u8[8192]{0}', space=vmem, size = 0x2000, scoped, tag = 'input window, operand 2, single buffered']
    #allocation8 [shape = 'u8[8192]{0}', space=vmem, size = 0x2000, scoped, tag = 'input window, operand 3, single buffered']
    #allocation9 [shape = 's32[1]{0}', space=sflag, size = 0x4, scoped, tag = 'scoped memory for tpu_custom_call.1']
    #allocation10 [shape = 'u8[4096]{0}', space=vmem, size = 0x1000, scoped, tag = 'output window, operand 0']
    #allocation11 [shape = 'u8[4096]{0}', space=vmem, size = 0x1000, scoped, tag = 'output window, operand 1']
    #allocation12 [shape = 's32[2]{0}', space=sflag, size = 0x8, scoped, tag = 'scoped memory for tpu_custom_call.1']
    #allocation13 [shape = 'u8[4096]{0}', space=vmem, size = 0x1000, scoped, tag = 'output window, operand 2']
    %12 = vsyncpa [#allocation3], 0
    %s13 = scalar_lea.sflag [#allocation3], 1
    %14 = vsyncpa %s13, 0
    %15 = vsyncpa [#allocation6], 0
    %16 = vsyncpa [#allocation9], 0
    %17 = vsyncpa [#allocation4], 0
    %s18 = scalar_lea.sflag [#allocation4], 1
    %19 = vsyncpa %s18, 0
    %20 = vsyncpa [#allocation12], 0
    %s21 = scalar_lea.sflag [#allocation12], 1
    %22 = vsyncpa %s21, 0
    loop: start=0, step=1, limit=4
    $region2: #{tpu_custom_call.1} parent=1 // loop_pre_header
      _
    $region3: #{tpu_custom_call.1} parent=1 // loop_header
      %s24 = sphi 0, %s28
      %p25 = scmp.ge.s32.totalorder %s24, 4
      %s31 = sphi 0, %s43
      %s32 = sphi 0, %s39
      %s33 = sphi 0, %s31
      %s34 = sphi 0, %s32
      %s35 = sphi 0, %s33
      %s36 = sphi 0, %s34
      %s48 = sphi 0, %s50
      %s51 = sphi 0, %s48
      %s52 = sphi 0, %s51
      %s68 = sphi 0, %s52
      %s72 = sphi 0, %s72
      %s74 = sphi 0, %s72
      %s75 = sphi 0, %s74
      %s89 = sphi 0, %s75
      %s93 = sphi 0, %s93
      %s95 = sphi 0, %s93
      %s96 = sphi 0, %s95
      %s110 = sphi 0, %s96
      %s114 = sphi 0, %s114
      %s116 = sphi 0, %s114
      %s117 = sphi 0, %s116
      %s131 = sphi 0, %s117
      %s139 = sphi 0, %s141
      %s142 = sphi 0, %s139
      %s143 = sphi 0, %s142
      %s159 = sphi 0, %s143
      %s167 = sphi 0, %s169
      %s170 = sphi 0, %s167
      %s171 = sphi 0, %s170
      %s187 = sphi 0, %s171
      %s195 = sphi 0, %s197
      %s198 = sphi 0, %s195
      %s199 = sphi 0, %s198
      %s215 = sphi 0, %s199
    $region4: #{tpu_custom_call.1} parent=1 // loop_header_branch
      %27 = sbr.rel (%p25) target = $region8
    $region5: #{tpu_custom_call.1} parent=1 // loop_body
      %s29 = ssub.s32 %s24, 1
      %s30 = ssub.s32 %s24, 2
      %s37 = sadd.s32 1, %s32
      %p38 = scmp.ge.s32.totalorder %s37, 1
      %s39 = scalar_select %p38, 0, %s37
      %s40 = sadd.s32 1, %s31
      %s41 = scalar_select %p38, %s40, %s31
      %p42 = scmp.ge.s32.totalorder %s41, 2
      %s43 = scalar_select %p42, 0, %s41
      %s44 = ssub.s32 %s31, %s43
      %s45 = ssub.s32 %s32, %s39
      %s46 = sor.u32 %s44, %s45
      %p47 = scmp.eq.s32.totalorder %s46, 0
      %s49 = sadd.s32 %s48, 1
      %s50 = scalar_select %p47, %s48, %s49
      %p53 = pneg %p47
      %p54 = scmp.eq.s32.totalorder %s24, 1
      %p55 = por %p53, %p54
      %p56 = scmp.ne.s32.totalorder %s48, %s51
      %p57 = scmp.eq.s32.totalorder %s24, 0
      %p58 = por %p56, %p57
      %p59 = scmp.ne.s32.totalorder %s48, %s51
      %p60 = scmp.eq.s32.totalorder %s29, 1
      %p61 = por %p59, %p60
      %p62 = scmp.ne.s32.totalorder %s51, %s52
      %p63 = scmp.eq.s32.totalorder %s29, 0
      %p64 = por %p62, %p63
      %p65 = scmp.ne.s32.totalorder %s51, %s52
      %p66 = scmp.eq.s32.totalorder %s30, 1
      %p67 = por %p65, %p66
      %p69 = scmp.ne.s32.totalorder %s52, %s68
      %p70 = scmp.eq.s32.totalorder %s30, 0
      %p71 = por %p69, %p70
      %s73 = sadd.s32 %s72, 1
      %p76 = scmp.eq.s32.totalorder %s24, 1
      %p77 = scmp.ne.s32.totalorder %s72, %s74
      %p78 = scmp.eq.s32.totalorder %s24, 0
      %p79 = por %p77, %p78
      %p80 = scmp.ne.s32.totalorder %s72, %s74
      %p81 = scmp.eq.s32.totalorder %s29, 1
      %p82 = por %p80, %p81
      %p83 = scmp.ne.s32.totalorder %s74, %s75
      %p84 = scmp.eq.s32.totalorder %s29, 0
      %p85 = por %p83, %p84
      %p86 = scmp.ne.s32.totalorder %s74, %s75
      %p87 = scmp.eq.s32.totalorder %s30, 1
      %p88 = por %p86, %p87
      %p90 = scmp.ne.s32.totalorder %s75, %s89
      %p91 = scmp.eq.s32.totalorder %s30, 0
      %p92 = por %p90, %p91
      %s94 = sadd.s32 %s93, 1
      %p97 = scmp.eq.s32.totalorder %s24, 1
      %p98 = scmp.ne.s32.totalorder %s93, %s95
      %p99 = scmp.eq.s32.totalorder %s24, 0
      %p100 = por %p98, %p99
      %p101 = scmp.ne.s32.totalorder %s93, %s95
      %p102 = scmp.eq.s32.totalorder %s29, 1
      %p103 = por %p101, %p102
      %p104 = scmp.ne.s32.totalorder %s95, %s96
      %p105 = scmp.eq.s32.totalorder %s29, 0
      %p106 = por %p104, %p105
      %p107 = scmp.ne.s32.totalorder %s95, %s96
      %p108 = scmp.eq.s32.totalorder %s30, 1
      %p109 = por %p107, %p108
      %p111 = scmp.ne.s32.totalorder %s96, %s110
      %p112 = scmp.eq.s32.totalorder %s30, 0
      %p113 = por %p111, %p112
      %s115 = sadd.s32 %s114, 1
      %p118 = scmp.eq.s32.totalorder %s24, 1
      %p119 = scmp.ne.s32.totalorder %s114, %s116
      %p120 = scmp.eq.s32.totalorder %s24, 0
      %p121 = por %p119, %p120
      %p122 = scmp.ne.s32.totalorder %s114, %s116
      %p123 = scmp.eq.s32.totalorder %s29, 1
      %p124 = por %p122, %p123
      %p125 = scmp.ne.s32.totalorder %s116, %s117
      %p126 = scmp.eq.s32.totalorder %s29, 0
      %p127 = por %p125, %p126
      %p128 = scmp.ne.s32.totalorder %s116, %s117
      %p129 = scmp.eq.s32.totalorder %s30, 1
      %p130 = por %p128, %p129
      %p132 = scmp.ne.s32.totalorder %s117, %s131
      %p133 = scmp.eq.s32.totalorder %s30, 0
      %p134 = por %p132, %p133
      %s135 = ssub.s32 %s31, %s43
      %s136 = ssub.s32 %s32, %s39
      %s137 = sor.u32 %s135, %s136
      %p138 = scmp.eq.s32.totalorder %s137, 0
      %s140 = sadd.s32 %s139, 1
      %s141 = scalar_select %p138, %s139, %s140
      %p144 = pneg %p138
      %p145 = scmp.eq.s32.totalorder %s24, 1
      %p146 = por %p144, %p145
      %p147 = scmp.ne.s32.totalorder %s139, %s142
      %p148 = scmp.eq.s32.totalorder %s24, 0
      %p149 = por %p147, %p148
      %p150 = scmp.ne.s32.totalorder %s139, %s142
      %p151 = scmp.eq.s32.totalorder %s29, 1
      %p152 = por %p150, %p151
      %p153 = scmp.ne.s32.totalorder %s142, %s143
      %p154 = scmp.eq.s32.totalorder %s29, 0
      %p155 = por %p153, %p154
      %p156 = scmp.ne.s32.totalorder %s142, %s143
      %p157 = scmp.eq.s32.totalorder %s30, 1
      %p158 = por %p156, %p157
      %p160 = scmp.ne.s32.totalorder %s143, %s159
      %p161 = scmp.eq.s32.totalorder %s30, 0
      %p162 = por %p160, %p161
      %s163 = ssub.s32 %s31, %s43
      %s164 = ssub.s32 %s32, %s39
      %s165 = sor.u32 %s163, %s164
      %p166 = scmp.eq.s32.totalorder %s165, 0
      %s168 = sadd.s32 %s167, 1
      %s169 = scalar_select %p166, %s167, %s168
      %p172 = pneg %p166
      %p173 = scmp.eq.s32.totalorder %s24, 1
      %p174 = por %p172, %p173
      %p175 = scmp.ne.s32.totalorder %s167, %s170
      %p176 = scmp.eq.s32.totalorder %s24, 0
      %p177 = por %p175, %p176
      %p178 = scmp.ne.s32.totalorder %s167, %s170
      %p179 = scmp.eq.s32.totalorder %s29, 1
      %p180 = por %p178, %p179
      %p181 = scmp.ne.s32.totalorder %s170, %s171
      %p182 = scmp.eq.s32.totalorder %s29, 0
      %p183 = por %p181, %p182
      %p184 = scmp.ne.s32.totalorder %s170, %s171
      %p185 = scmp.eq.s32.totalorder %s30, 1
      %p186 = por %p184, %p185
      %p188 = scmp.ne.s32.totalorder %s171, %s187
      %p189 = scmp.eq.s32.totalorder %s30, 0
      %p190 = por %p188, %p189
      %s191 = ssub.s32 %s31, %s43
      %s192 = ssub.s32 %s32, %s39
      %s193 = sor.u32 %s191, %s192
      %p194 = scmp.eq.s32.totalorder %s193, 0
      %s196 = sadd.s32 %s195, 1
      %s197 = scalar_select %p194, %s195, %s196
      %p200 = pneg %p194
      %p201 = scmp.eq.s32.totalorder %s24, 1
      %p202 = por %p200, %p201
      %p203 = scmp.ne.s32.totalorder %s195, %s198
      %p204 = scmp.eq.s32.totalorder %s24, 0
      %p205 = por %p203, %p204
      %p206 = scmp.ne.s32.totalorder %s195, %s198
      %p207 = scmp.eq.s32.totalorder %s29, 1
      %p208 = por %p206, %p207
      %p209 = scmp.ne.s32.totalorder %s198, %s199
      %p210 = scmp.eq.s32.totalorder %s29, 0
      %p211 = por %p209, %p210
      %p212 = scmp.ne.s32.totalorder %s198, %s199
      %p213 = scmp.eq.s32.totalorder %s30, 1
      %p214 = por %p212, %p213
      %p216 = scmp.ne.s32.totalorder %s199, %s215
      %p217 = scmp.eq.s32.totalorder %s30, 0
      %p218 = por %p216, %p217
      %p219 = scmp.le.s32.totalorder 1, %s24
      %p220 = scmp.lt.s32.totalorder %s24, 3
      %p221 = pnand %p219, %p220
      %p222 = pneg %p221
      // Predicated region
      $region9: #{tpu_custom_call.1} parent=5 // pred_check
        _
      $region10: #{tpu_custom_call.1} parent=5 // pred_check_branch
        %224 = sbr.rel (%p221) target = $region12
      $region11: #{tpu_custom_call.1} parent=5 // pred_region
        %s225 = ssub.s32 %s24, 1
        // Predicated region
        $region13: #{tpu_custom_call.1} parent=11 // pred_check
          %p226 = pneg %p85
        $region14: #{tpu_custom_call.1} parent=11 // pred_check_branch
          %228 = sbr.rel (%p226) target = $region16
        $region15: #{tpu_custom_call.1} parent=11 // pred_region
          %s230 = ssub.s32 256, 256
          %231 = vsyncadd [#allocation6], %s230
          %s232 = sshll.u32 [#allocation5], 4
          %s233 = int_to_ptr.vmem [resolvable:$true] %s232
          %238 = dma.hbm_to_vmem [thread:$0]  %s1, 256, %s233, [#allocation6], 64, 64, 4
        $region16: #{tpu_custom_call.1} parent=11 // pred_fallthru
          _
        // Predicated region
        $region17: #{tpu_custom_call.1} parent=11 // pred_check
          %p239 = pneg %p106
        $region18: #{tpu_custom_call.1} parent=11 // pred_check_branch
          %241 = sbr.rel (%p239) target = $region20
        $region19: #{tpu_custom_call.1} parent=11 // pred_region
          %s243 = ssub.s32 256, 256
          %244 = vsyncadd [#allocation6], %s243
          %s245 = sshll.u32 [#allocation7], 4
          %s246 = int_to_ptr.vmem [resolvable:$true] %s245
          %251 = dma.hbm_to_vmem [thread:$0]  %s2, 256, %s246, [#allocation6], 64, 64, 4
        $region20: #{tpu_custom_call.1} parent=11 // pred_fallthru
          _
        // Predicated region
        $region21: #{tpu_custom_call.1} parent=11 // pred_check
          %p252 = pneg %p127
        $region22: #{tpu_custom_call.1} parent=11 // pred_check_branch
          %254 = sbr.rel (%p252) target = $region24
        $region23: #{tpu_custom_call.1} parent=11 // pred_region
          %s256 = ssub.s32 256, 256
          %257 = vsyncadd [#allocation9], %s256
          %s258 = sshll.u32 [#allocation8], 4
          %s259 = int_to_ptr.vmem [resolvable:$true] %s258
          %264 = dma.hbm_to_vmem [thread:$0]  %s3, 256, %s259, [#allocation9], 64, 64, 4
        $region24: #{tpu_custom_call.1} parent=11 // pred_fallthru
          _
      $region12: #{tpu_custom_call.1} parent=5 // pred_fallthru
        _
      %p265 = scmp.lt.s32.totalorder %s24, 2
      // Predicated region
      $region25: #{tpu_custom_call.1} parent=5 // pred_check
        %p266 = pneg %p265
      $region26: #{tpu_custom_call.1} parent=5 // pred_check_branch
        %268 = sbr.rel (%p266) target = $region28
      $region27: #{tpu_custom_call.1} parent=5 // pred_region
        // Predicated region
        $region29: #{tpu_custom_call.1} parent=27 // pred_check
          %p269 = pneg %p58
        $region30: #{tpu_custom_call.1} parent=27 // pred_check_branch
          %271 = sbr.rel (%p269) target = $region32
        $region31: #{tpu_custom_call.1} parent=27 // pred_region
          %s272 = sand.u32 %s48, 1
          %s273 = scalar_lea.sflag [#allocation3], %s272
          %s274 = sand.u32 %s48, 1
          %s275 = smul.addr %s274, 4
          %s276 = scalar_lea.vmem [#allocation2], %s275
          %s278 = ssub.s32 64, 64
          %279 = vsyncadd %s273, %s278
          %s280 = sadd.s32 %s32, %s31
          %s281 = smul.addr %s280, 64
          %s282 = scalar_lea.hbm %s0, %s281
          %s284 = sshll.u32 %s276, 4
          %s285 = int_to_ptr.vmem [resolvable:$true] %s284
          %287 = dma.hbm_to_vmem [thread:$0]  %s282, 64, %s285, %s273
        $region32: #{tpu_custom_call.1} parent=27 // pred_fallthru
          _
      $region28: #{tpu_custom_call.1} parent=5 // pred_fallthru
        _
      %p288 = scmp.le.s32.totalorder 1, %s24
      %p289 = scmp.lt.s32.totalorder %s24, 3
      %p290 = pnand %p288, %p289
      %p291 = pneg %p290
      // Predicated region
      $region33: #{tpu_custom_call.1} parent=5 // pred_check
        _
      $region34: #{tpu_custom_call.1} parent=5 // pred_check_branch
        %293 = sbr.rel (%p290) target = $region36
      $region35: #{tpu_custom_call.1} parent=5 // pred_region
        %s294 = ssub.s32 %s24, 1
        %s295 = sand.u32 %s51, 1
        %s296 = scalar_lea.sflag [#allocation3], %s295
        %s297 = sand.u32 %s51, 1
        %s298 = smul.addr %s297, 4
        %s299 = scalar_lea.vmem [#allocation2], %s298
        // Predicated region
        $region37: #{tpu_custom_call.1} parent=35 // pred_check
          %p300 = pneg %p64
        $region38: #{tpu_custom_call.1} parent=35 // pred_check_branch
          %302 = sbr.rel (%p300) target = $region40
        $region39: #{tpu_custom_call.1} parent=35 // pred_region
          %303 = dma.done %s296, 64
        $region40: #{tpu_custom_call.1} parent=35 // pred_fallthru
          _
        // Predicated region
        $region41: #{tpu_custom_call.1} parent=35 // pred_check
          %p304 = pneg %p85
        $region42: #{tpu_custom_call.1} parent=35 // pred_check_branch
          %306 = sbr.rel (%p304) target = $region44
        $region43: #{tpu_custom_call.1} parent=35 // pred_region
          %307 = dma.done [#allocation6], 256
        $region44: #{tpu_custom_call.1} parent=35 // pred_fallthru
          _
        // Predicated region
        $region45: #{tpu_custom_call.1} parent=35 // pred_check
          %p308 = pneg %p106
        $region46: #{tpu_custom_call.1} parent=35 // pred_check_branch
          %310 = sbr.rel (%p308) target = $region48
        $region47: #{tpu_custom_call.1} parent=35 // pred_region
          %311 = dma.done [#allocation6], 256
        $region48: #{tpu_custom_call.1} parent=35 // pred_fallthru
          _
        // Predicated region
        $region49: #{tpu_custom_call.1} parent=35 // pred_check
          %p312 = pneg %p127
        $region50: #{tpu_custom_call.1} parent=35 // pred_check_branch
          %314 = sbr.rel (%p312) target = $region52
        $region51: #{tpu_custom_call.1} parent=35 // pred_region
          %315 = dma.done [#allocation9], 256
        $region52: #{tpu_custom_call.1} parent=35 // pred_fallthru
          _
        %s316 = sand.u32 %s51, 1
        %s317 = scalar_lea.sflag [#allocation3], %s316
        %s318 = sand.u32 %s51, 1
        %s319 = smul.addr %s318, 4
        %s320 = scalar_lea.vmem [#allocation2], %s319
        %p321 = pneg %p64
        %p322 = pneg %p61
        %p323 = pneg %p85
        %p324 = pneg %p82
        %p325 = pneg %p106
        %p326 = pneg %p103
        %p327 = pneg %p127
        %p328 = pneg %p124
        %p329 = pneg %p155
        %p330 = pneg %p152
        %s331 = sand.u32 %s142, 1
        %s332 = scalar_lea.sflag [#allocation4], %s331
        %s333 = sand.u32 %s142, 1
        %s334 = smul.addr %s333, 4
        %s335 = scalar_lea.vmem [#allocation10], %s334
        %p336 = pneg %p183
        %p337 = pneg %p180
        %s338 = sand.u32 %s29, 1
        %s339 = scalar_lea.sflag [#allocation12], %s338
        %s340 = sand.u32 %s170, 1
        %s341 = smul.addr %s340, 4
        %s342 = scalar_lea.vmem [#allocation11], %s341
        %p343 = pneg %p211
        %p344 = pneg %p208
        %s345 = sand.u32 %s29, 1
        %s346 = scalar_lea.sflag [#allocation12], %s345
        %s347 = sand.u32 %s198, 1
        %s348 = smul.addr %s347, 4
        %s349 = scalar_lea.vmem [#allocation13], %s348
        %v351 = vld [vmem:[%s299] sm:$0xf]
        %v352 = vld [vmem:[#allocation5] sm:$0xf]
        %v353 = vld [vmem:[#allocation5 + $0x4] sm:$0xf]
        %v354 = vld [vmem:[#allocation5 + $0x8] sm:$0xf]
        %v355 = vld [vmem:[#allocation5 + $0xc] sm:$0xf]
        %v360 = vunpack.c.l.b16 %v352
        %v361 = vunpack.c.l.b16 %v353
        %v362 = vunpack.c.l.b16 %v354
        %v363 = vunpack.c.l.b16 %v355
        %v364 = vpack.c.b16 %v361, %v360
        %v365 = vpack.c.b16 %v363, %v362
        %vm368 = vcmask 261120
        %v370 = vsel %vm368, %v351, 0
        %372 = vmatprep.subr.bf16.mxu0 0
        %373 = vmatpush1.bf16.msra.mxu0 %v364
        %374 = vmatprep.subr.bf16.mxu0 0
        %375 = vmatpush1.bf16.msra.mxu0 %v365
        %376 = vmatprep.subr.bf16.mxu0 0
        %377 = vmatpush1.bf16.msra.mxu0 0
        %378 = vmatprep.subr.bf16.mxu0 0
        %379 = vmatpush1.bf16.msra.mxu0 0
        %380 = vmatprep.subr.bf16.mxu0 0
        %381 = vmatpush1.bf16.msra.mxu0 0
        %382 = vmatprep.subr.bf16.mxu0 0
        %383 = vmatpush1.bf16.msra.mxu0 0
        %384 = vmatprep.subr.bf16.mxu0 0
        %385 = vmatpush1.bf16.msra.mxu0 0
        %386 = vmatprep.subr.bf16.mxu0 0
        %387 = vmatpush1.bf16.msra.mxu0 0
        %388 = vmatprep.subr.bf16.mxu0 0
        %389 = vmatpush1.bf16.msra.mxu0 0
        %390 = vmatprep.subr.bf16.mxu0 0
        %391 = vmatpush1.bf16.msra.mxu0 0
        %392 = vmatprep.subr.bf16.mxu0 0
        %393 = vmatpush1.bf16.msra.mxu0 0
        %394 = vmatprep.subr.bf16.mxu0 0
        %395 = vmatpush1.bf16.msra.mxu0 0
        %396 = vmatprep.subr.bf16.mxu0 0
        %397 = vmatpush1.bf16.msra.mxu0 0
        %398 = vmatprep.subr.bf16.mxu0 0
        %399 = vmatpush1.bf16.msra.mxu0 0
        %400 = vmatprep.subr.bf16.mxu0 0
        %401 = vmatpush1.bf16.msra.mxu0 0
        %402 = vmatprep.subr.bf16.mxu0 0
        %403 = vmatpush1.bf16.msra.mxu0 0
        %404 = vmatprep.mubr.bf16.mxu0 0
        %405 = vmatmul.mubr.bf16.gmra.mrb[0].mxu0 %v370
        %v406 = vpop.f32.mrb[0].mxu0
        %v407 = vadd.f32 0.0, %v406
        %v408 = vpop.f32.mrb[0].mxu0
        %v409 = vpop.f32.mrb[0].mxu0
        %v410 = vpop.f32.mrb[0].mxu0
        %411 = vdwg.mxu0
        %v412 = vmul.f32 %v407, 0.35355338
        %v413 = vpack.c.bf16 %v412, %v412
        %vm414 = vcmask 257024
        %415 = vst.msk [vmem:[%s335] sm:$0xf] %vm414, %v413
        %v416 = vld [vmem:[#allocation7] sm:$0xf]
        %v417 = vld [vmem:[#allocation7 + $0x4] sm:$0xf]
        %v418 = vld [vmem:[#allocation7 + $0x8] sm:$0xf]
        %v419 = vld [vmem:[#allocation7 + $0xc] sm:$0xf]
        %v424 = vunpack.c.l.b16 %v416
        %v425 = vunpack.c.l.b16 %v417
        %v426 = vunpack.c.l.b16 %v418
        %v427 = vunpack.c.l.b16 %v419
        %v428 = vpack.c.b16 %v425, %v424
        %v429 = vpack.c.b16 %v427, %v426
        %432 = vmatprep.subr.bf16.mxu0 0
        %433 = vmatpush1.bf16.msra.mxu0 %v428
        %434 = vmatprep.subr.bf16.mxu0 0
        %435 = vmatpush1.bf16.msra.mxu0 %v429
        %436 = vmatprep.subr.bf16.mxu0 0
        %437 = vmatpush1.bf16.msra.mxu0 0
        %438 = vmatprep.subr.bf16.mxu0 0
        %439 = vmatpush1.bf16.msra.mxu0 0
        %440 = vmatprep.subr.bf16.mxu0 0
        %441 = vmatpush1.bf16.msra.mxu0 0
        %442 = vmatprep.subr.bf16.mxu0 0
        %443 = vmatpush1.bf16.msra.mxu0 0
        %444 = vmatprep.subr.bf16.mxu0 0
        %445 = vmatpush1.bf16.msra.mxu0 0
        %446 = vmatprep.subr.bf16.mxu0 0
        %447 = vmatpush1.bf16.msra.mxu0 0
        %448 = vmatprep.subr.bf16.mxu0 0
        %449 = vmatpush1.bf16.msra.mxu0 0
        %450 = vmatprep.subr.bf16.mxu0 0
        %451 = vmatpush1.bf16.msra.mxu0 0
        %452 = vmatprep.subr.bf16.mxu0 0
        %453 = vmatpush1.bf16.msra.mxu0 0
        %454 = vmatprep.subr.bf16.mxu0 0
        %455 = vmatpush1.bf16.msra.mxu0 0
        %456 = vmatprep.subr.bf16.mxu0 0
        %457 = vmatpush1.bf16.msra.mxu0 0
        %458 = vmatprep.subr.bf16.mxu0 0
        %459 = vmatpush1.bf16.msra.mxu0 0
        %460 = vmatprep.subr.bf16.mxu0 0
        %461 = vmatpush1.bf16.msra.mxu0 0
        %462 = vmatprep.subr.bf16.mxu0 0
        %463 = vmatpush1.bf16.msra.mxu0 0
        %464 = vmatprep.mubr.bf16.mxu0 0
        %465 = vmatmul.mubr.bf16.gmra.mrb[0].mxu0 %v370
        %v466 = vpop.f32.mrb[0].mxu0
        %v467 = vadd.f32 0.0, %v466
        %v468 = vpop.f32.mrb[0].mxu0
        %v469 = vpop.f32.mrb[0].mxu0
        %v470 = vpop.f32.mrb[0].mxu0
        %471 = vdwg.mxu0
        %v472 = vpack.c.bf16 %v467, %v467
        %473 = vst.msk [vmem:[%s342] sm:$0xf] %vm414, %v472
        %v474 = vld [vmem:[#allocation8] sm:$0xf]
        %v475 = vld [vmem:[#allocation8 + $0x4] sm:$0xf]
        %v476 = vld [vmem:[#allocation8 + $0x8] sm:$0xf]
        %v477 = vld [vmem:[#allocation8 + $0xc] sm:$0xf]
        %v482 = vunpack.c.l.b16 %v474
        %v483 = vunpack.c.l.b16 %v475
        %v484 = vunpack.c.l.b16 %v476
        %v485 = vunpack.c.l.b16 %v477
        %v486 = vpack.c.b16 %v483, %v482
        %v487 = vpack.c.b16 %v485, %v484
        %490 = vmatprep.subr.bf16.mxu0 0
        %491 = vmatpush1.bf16.msra.mxu0 %v486
        %492 = vmatprep.subr.bf16.mxu0 0
        %493 = vmatpush1.bf16.msra.mxu0 %v487
        %494 = vmatprep.subr.bf16.mxu0 0
        %495 = vmatpush1.bf16.msra.mxu0 0
        %496 = vmatprep.subr.bf16.mxu0 0
        %497 = vmatpush1.bf16.msra.mxu0 0
        %498 = vmatprep.subr.bf16.mxu0 0
        %499 = vmatpush1.bf16.msra.mxu0 0
        %500 = vmatprep.subr.bf16.mxu0 0
        %501 = vmatpush1.bf16.msra.mxu0 0
        %502 = vmatprep.subr.bf16.mxu0 0
        %503 = vmatpush1.bf16.msra.mxu0 0
        %504 = vmatprep.subr.bf16.mxu0 0
        %505 = vmatpush1.bf16.msra.mxu0 0
        %506 = vmatprep.subr.bf16.mxu0 0
        %507 = vmatpush1.bf16.msra.mxu0 0
        %508 = vmatprep.subr.bf16.mxu0 0
        %509 = vmatpush1.bf16.msra.mxu0 0
        %510 = vmatprep.subr.bf16.mxu0 0
        %511 = vmatpush1.bf16.msra.mxu0 0
        %512 = vmatprep.subr.bf16.mxu0 0
        %513 = vmatpush1.bf16.msra.mxu0 0
        %514 = vmatprep.subr.bf16.mxu0 0
        %515 = vmatpush1.bf16.msra.mxu0 0
        %516 = vmatprep.subr.bf16.mxu0 0
        %517 = vmatpush1.bf16.msra.mxu0 0
        %518 = vmatprep.subr.bf16.mxu0 0
        %519 = vmatpush1.bf16.msra.mxu0 0
        %520 = vmatprep.subr.bf16.mxu0 0
        %521 = vmatpush1.bf16.msra.mxu0 0
        %522 = vmatprep.mubr.bf16.mxu0 0
        %523 = vmatmul.mubr.bf16.gmra.mrb[0].mxu0 %v370
        %v524 = vpop.f32.mrb[0].mxu0
        %v525 = vadd.f32 0.0, %v524
        %v526 = vpop.f32.mrb[0].mxu0
        %v527 = vpop.f32.mrb[0].mxu0
        %v528 = vpop.f32.mrb[0].mxu0
        %529 = vdwg.mxu0
        %v530 = vpack.c.bf16 %v525, %v525
        %531 = vst.msk [vmem:[%s349] sm:$0xf] %vm414, %v530
        %s532 = sand.u32 %s142, 1
        %s533 = scalar_lea.sflag [#allocation4], %s532
        %s534 = sand.u32 %s142, 1
        %s535 = smul.addr %s534, 4
        %s536 = scalar_lea.vmem [#allocation10], %s535
        %s537 = sand.u32 %s29, 1
        %s538 = scalar_lea.sflag [#allocation12], %s537
        %s539 = sand.u32 %s170, 1
        %s540 = smul.addr %s539, 4
        %s541 = scalar_lea.vmem [#allocation11], %s540
        %s542 = sand.u32 %s29, 1
        %s543 = scalar_lea.sflag [#allocation12], %s542
        %s544 = sand.u32 %s198, 1
        %s545 = smul.addr %s544, 4
        %s546 = scalar_lea.vmem [#allocation13], %s545
        // Predicated region
        $region53: #{tpu_custom_call.1} parent=35 // pred_check
          %p547 = pneg %p152
        $region54: #{tpu_custom_call.1} parent=35 // pred_check_branch
          %549 = sbr.rel (%p547) target = $region56
        $region55: #{tpu_custom_call.1} parent=35 // pred_region
          %s551 = ssub.s32 64, 64
          %552 = vsyncadd %s533, %s551
          %s553 = sadd.s32 %s34, %s33
          %s554 = smul.addr %s553, 64
          %s555 = scalar_lea.hbm %s4, %s554
          %s557 = sshll.u32 %s536, 4
          %s558 = int_to_ptr.vmem [resolvable:$true] %s557
          %560 = dma.vmem_to_hbm [thread:$0]  %s558, 64, %s555, %s533
        $region56: #{tpu_custom_call.1} parent=35 // pred_fallthru
          _
        // Predicated region
        $region57: #{tpu_custom_call.1} parent=35 // pred_check
          %p561 = pneg %p180
        $region58: #{tpu_custom_call.1} parent=35 // pred_check_branch
          %563 = sbr.rel (%p561) target = $region60
        $region59: #{tpu_custom_call.1} parent=35 // pred_region
          %s565 = ssub.s32 64, 64
          %566 = vsyncadd %s538, %s565
          %s567 = sadd.s32 %s34, %s33
          %s568 = smul.addr %s567, 64
          %s569 = scalar_lea.hbm %s5, %s568
          %s571 = sshll.u32 %s541, 4
          %s572 = int_to_ptr.vmem [resolvable:$true] %s571
          %574 = dma.vmem_to_hbm [thread:$0]  %s572, 64, %s569, %s538
        $region60: #{tpu_custom_call.1} parent=35 // pred_fallthru
          _
        // Predicated region
        $region61: #{tpu_custom_call.1} parent=35 // pred_check
          %p575 = pneg %p208
        $region62: #{tpu_custom_call.1} parent=35 // pred_check_branch
          %577 = sbr.rel (%p575) target = $region64
        $region63: #{tpu_custom_call.1} parent=35 // pred_region
          %s579 = ssub.s32 64, 64
          %580 = vsyncadd %s543, %s579
          %s581 = sadd.s32 %s34, %s33
          %s582 = smul.addr %s581, 64
          %s583 = scalar_lea.hbm %s6, %s582
          %s585 = sshll.u32 %s546, 4
          %s586 = int_to_ptr.vmem [resolvable:$true] %s585
          %588 = dma.vmem_to_hbm [thread:$0]  %s586, 64, %s583, %s543
        $region64: #{tpu_custom_call.1} parent=35 // pred_fallthru
          _
      $region36: #{tpu_custom_call.1} parent=5 // pred_fallthru
        _
      %p589 = scmp.le.s32.totalorder 2, %s24
      // Predicated region
      $region65: #{tpu_custom_call.1} parent=5 // pred_check
        %p590 = pneg %p589
      $region66: #{tpu_custom_call.1} parent=5 // pred_check_branch
        %592 = sbr.rel (%p590) target = $region68
      $region67: #{tpu_custom_call.1} parent=5 // pred_region
        %s593 = ssub.s32 %s24, 2
        // Predicated region
        $region69: #{tpu_custom_call.1} parent=67 // pred_check
          %p594 = pneg %p158
        $region70: #{tpu_custom_call.1} parent=67 // pred_check_branch
          %596 = sbr.rel (%p594) target = $region72
        $region71: #{tpu_custom_call.1} parent=67 // pred_region
          %s597 = sand.u32 %s143, 1
          %s598 = scalar_lea.sflag [#allocation4], %s597
          %s599 = sand.u32 %s143, 1
          %s600 = smul.addr %s599, 4
          %s601 = scalar_lea.vmem [#allocation10], %s600
          %602 = dma.done %s598, 64
        $region72: #{tpu_custom_call.1} parent=67 // pred_fallthru
          _
        // Predicated region
        $region73: #{tpu_custom_call.1} parent=67 // pred_check
          %p603 = pneg %p186
        $region74: #{tpu_custom_call.1} parent=67 // pred_check_branch
          %605 = sbr.rel (%p603) target = $region76
        $region75: #{tpu_custom_call.1} parent=67 // pred_region
          %s606 = sand.u32 %s30, 1
          %s607 = scalar_lea.sflag [#allocation12], %s606
          %s608 = sand.u32 %s171, 1
          %s609 = smul.addr %s608, 4
          %s610 = scalar_lea.vmem [#allocation11], %s609
          %611 = dma.done %s607, 64
        $region76: #{tpu_custom_call.1} parent=67 // pred_fallthru
          _
        // Predicated region
        $region77: #{tpu_custom_call.1} parent=67 // pred_check
          %p612 = pneg %p214
        $region78: #{tpu_custom_call.1} parent=67 // pred_check_branch
          %614 = sbr.rel (%p612) target = $region80
        $region79: #{tpu_custom_call.1} parent=67 // pred_region
          %s615 = sand.u32 %s30, 1
          %s616 = scalar_lea.sflag [#allocation12], %s615
          %s617 = sand.u32 %s199, 1
          %s618 = smul.addr %s617, 4
          %s619 = scalar_lea.vmem [#allocation13], %s618
          %620 = dma.done %s616, 64
        $region80: #{tpu_custom_call.1} parent=67 // pred_fallthru
          _
      $region68: #{tpu_custom_call.1} parent=5 // pred_fallthru
        _
    $region6: #{tpu_custom_call.1} parent=1 // loop_footer
      %s28 = sadd.s32 1, %s24
    $region7: #{tpu_custom_call.1} parent=1 // loop_footer_branch
      %23 = sbr.rel target = $region3
    $region8: #{tpu_custom_call.1} parent=1 // loop_exit
      _
    %621 = vsyncpa [#allocation3], 1
    %s622 = scalar_lea.sflag [#allocation3], 1
    %623 = vsyncpa %s622, 1
    %624 = vsyncpa [#allocation6], 1
    %625 = vsyncpa [#allocation9], 1
    %626 = vsyncpa [#allocation4], 1
    %s627 = scalar_lea.sflag [#allocation4], 1
    %628 = vsyncpa %s627, 1
    %629 = vsyncpa [#allocation12], 1
    %s630 = scalar_lea.sflag [#allocation12], 1
    %631 = vsyncpa %s630, 1

</llo_original>
